<compile_context>
chip_gen: v6e
topology: v6e:2x2x1
jax: 0.10.0
libtpu: 0.0.40
codegen_flags: <defaults>
</compile_context>

<pallas_src>
import functools
import math

import jax
import jax.numpy as jnp
from jax import lax
from jax.experimental import pallas as pl
from jax.experimental.pallas import tpu as pltpu

_LANE = 128


def _pick_tile(total, target, align=_LANE):
    """Largest multiple of `align` that divides `total` and is <= target; else full extent."""
    if total <= target:
        return total
    best = None
    t = align
    while t <= target:
        if total % t == 0:
            best = t
        t += align
    return best if best is not None else total


def _cparams(semantics, est_bytes):
    # Explicit scoped-VMEM budget: post-tiling footprint + ~50% headroom, clamped to a
    # range that is safe on v5e/v6e (128 MiB) and v7x (64 MiB) physical VMEM.
    limit = int(min(max(est_bytes * 3 // 2 + (1 << 20), 8 << 20), 56 << 20))
    return pltpu.CompilerParams(dimension_semantics=semantics, vmem_limit_bytes=limit)


# ----------------------------------------------------------------------------
# Kernel 1: memory cross-attention (computed once; softmax on the lane axis;
#           query-HW tiled; bf16 MXU operands, f32 softmax math + accumulation)
#   p = softmax_THW( m_in^T q_in / sqrt(De) ) ; mem = m_out @ p
# ----------------------------------------------------------------------------
def _mem_attn_kernel(m_ref, q_ref, mo_ref, out_ref, *, scale):
    # m_ref: (1, De, L) bf16   q_ref: (1, De, tq) bf16   mo_ref: (1, Do, L) bf16
    s = lax.dot_general(q_ref[0], m_ref[0], (((0,), (0,)), ((), ())),
                        preferred_element_type=jnp.float32) * scale       # (tq, L) f32
    s = s - jnp.max(s, axis=-1, keepdims=True)
    p = jnp.exp(s)
    p = p * pl.reciprocal(jnp.sum(p, axis=-1, keepdims=True), approx=True)
    # out[do, j] = sum_l mo[do, l] * p[j, l]  (bf16 operands, f32 accumulate)
    out_ref[0] = lax.dot_general(mo_ref[0], p.astype(jnp.bfloat16),
                                 (((1,), (1,)), ((), ())),
                                 preferred_element_type=jnp.float32)


def mem_attention(m_in_flat, q_in_flat, m_out_flat):
    B, De, L = m_in_flat.shape
    HW = q_in_flat.shape[2]
    Do = m_out_flat.shape[1]
    tq = _pick_tile(HW, target=256)
    # TODO(synk): for very large T*HW switch to an online-softmax accumulation over L blocks.
    est = (2 * 2 * (De * L + Do * L + De * tq)   # dbl-buffered bf16 inputs
           + 2 * 4 * Do * tq                     # dbl-buffered f32 output tile
           + 3 * 4 * tq * L)                     # softmax temporaries
    kernel = functools.partial(_mem_attn_kernel, scale=1.0 / math.sqrt(De))
    return pl.pallas_call(
        kernel,
        out_shape=jax.ShapeDtypeStruct((B, Do, HW), jnp.float32),
        grid=(B, HW // tq),
        in_specs=[
            pl.BlockSpec((1, De, L), lambda b, i: (b, 0, 0)),
            pl.BlockSpec((1, De, tq), lambda b, i: (b, 0, i)),
            pl.BlockSpec((1, Do, L), lambda b, i: (b, 0, 0)),
        ],
        out_specs=pl.BlockSpec((1, Do, tq), lambda b, i: (b, 0, i)),
        compiler_params=_cparams(("parallel", "parallel"), est),
    )(m_in_flat, q_in_flat, m_out_flat)


# ----------------------------------------------------------------------------
# Kernel 2: fused edge pipeline, column-tiled.
#   grid = (batch, column-tile, source-frame y); for every target frame x (columns)
#   accumulate over y != x:  p = softmax_HW( (mi_y @ We^T) @ qi_x ) ; acc += mo_y @ p
#   finalize: conv_fusion (1x1 conv) folded in.
# ----------------------------------------------------------------------------
def _edge_fused_kernel(we_ref, wf_ref, bf_ref, qi_ref, mi_ref, mo_ref,
                       out_ref, k_scr, acc_scr, *, hw, tile_cols):
    c = pl.program_id(1)
    y = pl.program_id(2)
    ny = pl.num_programs(2)

    @pl.when(y == 0)
    def _():
        # Reassociation: k[e, col] = sum_d We[d, e] * qi[d, col]  (once per column tile)
        k = lax.dot_general(we_ref[...], qi_ref[0], (((0,), (0,)), ((), ())),
                            preferred_element_type=jnp.float32)
        k_scr[...] = k.astype(jnp.bfloat16)
        acc_scr[...] = jnp.zeros_like(acc_scr)

    mi = mi_ref[0, 0]                       # (De, hw) bf16, source frame y
    mo = mo_ref[0, 0]                       # (Do, hw) bf16
    # p[l, col] = sum_e mi[e, l] * k[e, col]
    p = lax.dot_general(mi, k_scr[...], (((0,), (0,)), ((), ())),
                        preferred_element_type=jnp.float32)
    # softmax over source positions l (torch softmax dim=1); f32 math
    p = p - jnp.max(p, axis=0, keepdims=True)
    p = jnp.exp(p)
    p = p * pl.reciprocal(jnp.sum(p, axis=0, keepdims=True), approx=True)
    # drop contribution of target frame x == y (edge_set.pop(x) in the reference)
    col = c * tile_cols + lax.broadcasted_iota(jnp.int32, (1, tile_cols), 1)
    p = jnp.where(col // hw != y, p, 0.0)
    acc_scr[...] += jnp.dot(mo, p.astype(jnp.bfloat16),
                            preferred_element_type=jnp.float32)

    @pl.when(y == ny - 1)
    def _():
        # conv_fusion (1x1 conv) folded into the finalize step.
        out_ref[0] = (jnp.dot(wf_ref[...], acc_scr[...].astype(jnp.bfloat16),
                              preferred_element_type=jnp.float32) + bf_ref[...])


def edge_features_fused(linear_e_w, conv_w, conv_b,
                        m_in_all_flat, m_in_all_frames, m_out_all_frames):
    B, De, cols = m_in_all_flat.shape
    nf = m_in_all_frames.shape[1]          # T + 1 frames
    hw = cols // nf
    Do = m_out_all_frames.shape[2]
    tc = _pick_tile(cols, target=1024)     # <=1024 lanes keeps v7x (64 MiB VMEM) comfortable
    est = (2 * (De * De + Do * Do) + 4 * Do          # weights (bf16) + bias
           + 2 * 2 * ((De + Do) * hw + De * tc)      # dbl-buffered bf16 frame / qi blocks
           + 2 * 4 * Do * tc                         # dbl-buffered f32 output tile
           + 2 * De * tc + 4 * Do * tc               # k_scr bf16 + acc_scr f32
           + 2 * 4 * hw * tc)                        # p temporaries
    kernel = functools.partial(_edge_fused_kernel, hw=hw, tile_cols=tc)
    return pl.pallas_call(
        kernel,
        out_shape=jax.ShapeDtypeStruct((B, Do, cols), jnp.float32),
        grid=(B, cols // tc, nf),
        in_specs=[
            pl.BlockSpec((De, De), lambda b, c, y: (0, 0)),
            pl.BlockSpec((Do, Do), lambda b, c, y: (0, 0)),
            pl.BlockSpec((Do, 1), lambda b, c, y: (0, 0)),
            pl.BlockSpec((1, De, tc), lambda b, c, y: (b, 0, c)),
            pl.BlockSpec((1, 1, De, hw), lambda b, c, y: (b, y, 0, 0)),
            pl.BlockSpec((1, 1, Do, hw), lambda b, c, y: (b, y, 0, 0)),
        ],
        out_specs=pl.BlockSpec((1, Do, tc), lambda b, c, y: (b, 0, c)),
        scratch_shapes=[pltpu.VMEM((De, tc), jnp.bfloat16),
                        pltpu.VMEM((Do, tc), jnp.float32)],
        compiler_params=_cparams(("parallel", "parallel", "arbitrary"), est),
    )(linear_e_w, conv_w, conv_b, m_in_all_flat, m_in_all_frames, m_out_all_frames)


# ----------------------------------------------------------------------------
# Kernel 3: ConvGRU (1x1 conv) — concatenated gate weights, lane-tiled (C, N) layout,
#           bf16 matmul operands / f32 gate math, hoisted loop-invariant hidden path.
# ----------------------------------------------------------------------------
def _convgru_chain_kernel(wx_ref, whzr_ref, wnh_ref, b_ref, x_ref, h_ref, out_ref,
                          *, steps, emit_all):
    C = h_ref.shape[0]
    N = h_ref.shape[1]
    wx, whzr, wnh = wx_ref[...], whzr_ref[...], wnh_ref[...]      # bf16 weights
    b = b_ref[...]                                                # (3C, 1) f32
    h_bf = h_ref[...]                                             # (C, N) bf16 hidden
    h = h_bf.astype(jnp.float32)
    # Loop-invariant hidden-path gates and bias broadcasts (hoisted out of the unrolled chain;
    # the hidden state = mem_mean is constant across all propagate layers).
    ghzr = jnp.dot(whzr, h_bf, preferred_element_type=jnp.float32)            # (2C, N)
    pre_z = ghzr[:C] + b[:C]
    pre_r = ghzr[C:] + b[C:2 * C]
    bn = jnp.broadcast_to(b[2 * C:], (C, N))
    x = x_ref[...].astype(jnp.float32)
    for k in range(steps):                        # static unroll (propagate_layers = 5)
        gx = jnp.dot(wx, x.astype(jnp.bfloat16), preferred_element_type=jnp.float32)
        z = jax.nn.sigmoid(gx[:C] + pre_z)
        r = jax.nn.sigmoid(gx[C:2 * C] + pre_r)
        n = jnp.tanh(gx[2 * C:]
                     + jnp.dot(wnh, (r * h).astype(jnp.bfloat16),
                               preferred_element_type=jnp.float32)
                     + bn)
        x = (1.0 - z) * h + z * n
        if emit_all:
            out_ref[k] = x
    if not emit_all:
        out_ref[...] = x


def convgru_run(gru, x_cn, h_cn, steps, emit_all):
    C, N = h_cn.shape
    tile = _pick_tile(N, target=256 if emit_all else 512)
    n_out = steps if emit_all else 1
    est = (2 * 6 * C * C + 4 * 3 * C          # bf16 gate weights + f32 bias
           + 2 * 2 * 2 * C * tile             # dbl-buffered bf16 x / h tiles
           + n_out * 2 * 4 * C * tile         # dbl-buffered f32 output
           + 10 * 4 * C * tile)               # gate temporaries
    if emit_all:
        out_shape = jax.ShapeDtypeStruct((steps, C, N), jnp.float32)
        out_spec = pl.BlockSpec((steps, C, tile), lambda i: (0, 0, i))
    else:
        out_shape = jax.ShapeDtypeStruct((C, N), jnp.float32)
        out_spec = pl.BlockSpec((C, tile), lambda i: (0, i))
    in_specs = [
        pl.BlockSpec((3 * C, C), lambda i: (0, 0)),
        pl.BlockSpec((2 * C, C), lambda i: (0, 0)),
        pl.BlockSpec((C, C), lambda i: (0, 0)),
        pl.BlockSpec((3 * C, 1), lambda i: (0, 0)),
        pl.BlockSpec((C, tile), lambda i: (0, i)),
        pl.BlockSpec((C, tile), lambda i: (0, i)),
    ]
    kernel = functools.partial(_convgru_chain_kernel, steps=steps, emit_all=emit_all)
    return pl.pallas_call(
        kernel,
        out_shape=out_shape,
        grid=(N // tile,),
        in_specs=in_specs,
        out_specs=out_spec,
        compiler_params=_cparams(("parallel",), est),
    )(gru["wx"], gru["whzr"], gru["wnh"], gru["b"], x_cn, h_cn)


# ----------------------------------------------------------------------------
# Host-side glue
# ----------------------------------------------------------------------------
def _prep_gru(p):
    bf16 = jnp.bfloat16
    return {
        "wx": jnp.concatenate([p["wzx"], p["wrx"], p["wnx"]], axis=0).astype(bf16),  # (3C, C)
        "whzr": jnp.concatenate([p["wzh"], p["wrh"]], axis=0).astype(bf16),          # (2C, C)
        "wnh": p["wnh"].astype(bf16),                                                # (C, C)
        "b": jnp.concatenate([p["bz"], p["br"], p["bn"]], axis=0).astype(jnp.float32),
    }


def _fold_batch(x_bcn):
    B, C, N = x_bcn.shape
    return jnp.transpose(x_bcn, (1, 0, 2)).reshape(C, B * N)


def _unfold_batch(x_cn, B, C, N):
    return jnp.transpose(x_cn.reshape(C, B, N), (1, 0, 2))


def memory_forward(params, m_in, m_out, q_in, q_out, propagate_layers=5,
                   compute_unused_edge_gru=False):
    B, De, T, H, W = m_in.shape
    Do = m_out.shape[1]
    HW = H * W
    q_out0 = q_out

    if propagate_layers < 1:
        return jnp.concatenate([q_out, q_out0], axis=1), 10

    bf16 = jnp.bfloat16
    # --- loop-invariant flattening (identical for all propagate layers), bf16 for the MXU ---
    m_in_flat = m_in.reshape(B, De, T * HW).astype(bf16)
    q_in_flat = q_in.reshape(B, De, HW).astype(bf16)
    m_out_flat = m_out.reshape(B, Do, T * HW).astype(bf16)

    # --- memory cross-attention: identical every layer -> computed once ---
    mem = mem_attention(m_in_flat, q_in_flat, m_out_flat)            # (B, Do, HW) f32
    mem_mean = mem.reshape(B, Do, H, W)

    if T < 2:
        return jnp.concatenate([mem_mean, q_out0], axis=1), 10

    # --- ConvGRU_h chain: all propagate_layers sequential q_out updates share the same
    #     mem_mean, so the whole chain runs in one fused, lane-tiled (C, B*HW) kernel. ---
    gru_h = _prep_gru(params["gru_h"])
    mem_cn = _fold_batch(mem).astype(bf16)                           # hidden (constant)
    q_cn = _fold_batch(q_out.reshape(B, Do, HW)).astype(bf16)        # recurrent input
    if compute_unused_edge_gru:
        q_states = convgru_run(gru_h, q_cn, mem_cn, propagate_layers, emit_all=True)
        q_last = q_states[propagate_layers - 1]
    else:
        q_last = convgru_run(gru_h, q_cn, mem_cn, propagate_layers, emit_all=False)
    q_out_final = _unfold_batch(q_last, B, Do, HW).reshape(B, Do, H, W)

    if compute_unused_edge_gru:
        # Output-dead branch of the reference forward (edge features + ConvGRU_m):
        # m_out_all is rebuilt from the original m_out every layer, so nothing here feeds
        # mem_out.  Flag-gated for fidelity; under jax.jit XLA DCEs it away automatically.
        gru_m = _prep_gru(params["gru_m"])
        we = params["linear_e_w"].astype(bf16)
        wf = params["conv_fusion_w"].astype(bf16)
        bfb = params["conv_fusion_b"].astype(jnp.float32)
        m_in_all_flat = jnp.concatenate([m_in_flat, q_in_flat], axis=2)      # (B, De, (T+1)HW)
        m_in_frames = jnp.transpose(m_in.reshape(B, De, T, HW), (0, 2, 1, 3)).astype(bf16)
        m_in_all_frames = jnp.concatenate([m_in_frames, q_in_flat[:, None]], axis=1)
        m_out_frames = jnp.transpose(m_out.reshape(B, Do, T, HW), (0, 2, 1, 3)).astype(bf16)
        h_m_cn = _fold_batch(m_out.reshape(B, Do, T * HW)).astype(bf16)      # (Do, B*T*HW)

        for kk in range(propagate_layers):
            q_state = (q_out.reshape(B, Do, HW) if kk == 0
                       else _unfold_batch(q_states[kk - 1], B, Do, HW))
            m_out_all_frames = jnp.concatenate(
                [m_out_frames, q_state[:, None].astype(bf16)], axis=1)       # (B, T+1, Do, HW)
            edge_all = edge_features_fused(we, wf, bfb, m_in_all_flat,
                                           m_in_all_frames, m_out_all_frames)
            # fused ConvGRU_m over all T memory frames + batch (lane-tiled); result is never
            # consumed (matches the reference, where m_out_all is discarded).
            x_m_cn = _fold_batch(edge_all[:, :, :T * HW]).astype(bf16)
            _ = convgru_run(gru_m, x_m_cn, h_m_cn, 1, emit_all=False)

    mem_out = jnp.concatenate([q_out_final, q_out0], axis=1)
    return mem_out, 10


def init_params(key, De, Do):
    ks = jax.random.split(key, 8)

    def w(k, shape, scale=0.05):
        return (scale * jax.random.normal(k, shape)).astype(jnp.float32)

    def gru(k0):
        kk = jax.random.split(k0, 9)
        return {
            "wzx": w(kk[0], (Do, Do)), "wzh": w(kk[1], (Do, Do)), "bz": w(kk[2], (Do, 1)),
            "wrx": w(kk[3], (Do, Do)), "wrh": w(kk[4], (Do, Do)), "br": w(kk[5], (Do, 1)),
            "wnx": w(kk[6], (Do, Do)), "wnh": w(kk[7], (Do, Do)), "bn": w(kk[8], (Do, 1)),
        }

    return {
        "linear_e_w": w(ks[0], (De, De)),          # nn.Linear(De, De, bias=False).weight
        "conv_fusion_w": w(ks[1], (Do, Do)),       # nn.Conv2d(Do, Do, 1).weight (squeezed)
        "conv_fusion_b": w(ks[2], (Do, 1)),        # nn.Conv2d bias
        "gru_m": gru(ks[3]),
        "gru_h": gru(ks[4]),
    }


if __name__ == "__main__":
    # Small shapes consistent with the module (original: De=128, Do=512, T frames, HxW map)
    B, De, Do, T, H, W = 2, 32, 64, 2, 4, 4
    key = jax.random.PRNGKey(0)
    k1, k2, k3, k4, k5 = jax.random.split(key, 5)
    m_in = jax.random.normal(k1, (B, De, T, H, W), dtype=jnp.float32)
    m_out = jax.random.normal(k2, (B, Do, T, H, W), dtype=jnp.float32)
    q_in = jax.random.normal(k3, (B, De, H, W), dtype=jnp.float32)
    q_out = jax.random.normal(k4, (B, Do, H, W), dtype=jnp.float32)
    params = init_params(k5, De, Do)

    # Live path (edge / ConvGRU_m branch skipped: it never feeds the module output).
    mem_out, flag = memory_forward(params, m_in, m_out, q_in, q_out)
    jax.block_until_ready(mem_out)
    assert mem_out.shape == (B, 2 * Do, H, W)
    assert flag == 10

    # Also exercise the full-fidelity path once (edge pipeline + ConvGRU_m kernels).
    mem_out_full, _ = memory_forward(params, m_in, m_out, q_in, q_out,
                                     compute_unused_edge_gru=True)
    jax.block_until_ready(mem_out_full)
    assert mem_out_full.shape == (B, 2 * Do, H, W)

    print("KERNEL_OK")
</pallas_src>

<mosaic_0001>
module attributes {stable_mosaic.version = 11 : i64} {
  func.func @_mem_attn_kernel(%arg0: i32, %arg1: i32, %arg2: memref<1x32x32xbf16, #tpu.memory_space<vmem>>, %arg3: memref<1x32x16xbf16, #tpu.memory_space<vmem>>, %arg4: memref<1x64x32xbf16, #tpu.memory_space<vmem>>, %arg5: memref<1x64x16xf32, #tpu.memory_space<vmem>>) attributes {dimension_semantics = [#tpu.dimension_semantics<parallel>, #tpu.dimension_semantics<parallel>], iteration_bounds = array<i64: 2, 1>, scalar_prefetch = 0 : i64, scratch_operands = 0 : i64, tpu.core_type = #tpu.core_type<tc>, window_params = [{transform_indices = @transform_0, window_bounds = array<i64: 1, 32, 32>}, {transform_indices = @transform_1, window_bounds = array<i64: 1, 32, 16>}, {transform_indices = @transform_2, window_bounds = array<i64: 1, 64, 32>}, {transform_indices = @transform_3, window_bounds = array<i64: 1, 64, 16>}]} {
    %c0 = arith.constant 0 : index
    %c0_0 = arith.constant 0 : index
    %c0_1 = arith.constant 0 : index
    %0 = vector.load %arg3[%c0, %c0_0, %c0_1] : memref<1x32x16xbf16, #tpu.memory_space<vmem>>, vector<1x32x16xbf16>
    %1 = vector.shape_cast %0 : vector<1x32x16xbf16> to vector<32x16xbf16>
    %c0_2 = arith.constant 0 : index
    %c0_3 = arith.constant 0 : index
    %c0_4 = arith.constant 0 : index
    %2 = vector.load %arg2[%c0_2, %c0_3, %c0_4] : memref<1x32x32xbf16, #tpu.memory_space<vmem>>, vector<1x32x32xbf16>
    %3 = vector.shape_cast %2 : vector<1x32x32xbf16> to vector<32x32xbf16>
    %cst = arith.constant dense<0.000000e+00> : vector<16x32xf32>
    %4 = tpu.matmul %1, %3, %cst {dimension_numbers = #tpu.dot_dimension_numbers<[0], [0], [1], [1], [0, 1, 1, 1], [], []>} : vector<32x16xbf16>, vector<32x32xbf16>, vector<16x32xf32> -> vector<16x32xf32>
    %cst_5 = arith.constant 0.176776692 : f32
    %5 = vector.broadcast %cst_5 : f32 to vector<16x32xf32>
    %6 = arith.mulf %4, %5 : vector<16x32xf32>
    %cst_6 = arith.constant dense<0xFF800000> : vector<16xf32>
    %7 = vector.multi_reduction <maximumf>, %6, %cst_6 [1] : vector<16x32xf32> to vector<16xf32>
    %8 = vector.shape_cast %7 : vector<16xf32> to vector<16x1xf32>
    %9 = vector.broadcast %8 : vector<16x1xf32> to vector<16x32xf32>
    %10 = arith.subf %6, %9 : vector<16x32xf32>
    %11 = math.exp %10 : vector<16x32xf32>
    %cst_7 = arith.constant dense<0.000000e+00> : vector<16xf32>
    %12 = vector.multi_reduction <add>, %11, %cst_7 [1] : vector<16x32xf32> to vector<16xf32>
    %13 = vector.shape_cast %12 : vector<16xf32> to vector<16x1xf32>
    %14 = tpu.reciprocal %13 {approx = true} : vector<16x1xf32> -> vector<16x1xf32>
    %15 = vector.broadcast %14 : vector<16x1xf32> to vector<16x32xf32>
    %16 = arith.mulf %11, %15 : vector<16x32xf32>
    %c0_8 = arith.constant 0 : index
    %c0_9 = arith.constant 0 : index
    %c0_10 = arith.constant 0 : index
    %17 = vector.load %arg4[%c0_8, %c0_9, %c0_10] : memref<1x64x32xbf16, #tpu.memory_space<vmem>>, vector<1x64x32xbf16>
    %18 = vector.shape_cast %17 : vector<1x64x32xbf16> to vector<64x32xbf16>
    %19 = arith.truncf %16 : vector<16x32xf32> to vector<16x32xbf16>
    %cst_11 = arith.constant dense<0.000000e+00> : vector<64x16xf32>
    %20 = tpu.matmul %18, %19, %cst_11 {dimension_numbers = #tpu.dot_dimension_numbers<[1], [1], [0], [0], [0, 0, 1, 0], [], []>} : vector<64x32xbf16>, vector<16x32xbf16>, vector<64x16xf32> -> vector<64x16xf32>
    %c0_12 = arith.constant 0 : index
    %c0_13 = arith.constant 0 : index
    %c0_14 = arith.constant 0 : index
    %21 = vector.load %arg5[%c0_12, %c0_13, %c0_14] : memref<1x64x16xf32, #tpu.memory_space<vmem>>, vector<1x64x16xf32>
    %22 = vector.shape_cast %21 : vector<1x64x16xf32> to vector<64x16xf32>
    %23 = vector.shape_cast %20 : vector<64x16xf32> to vector<1x64x16xf32>
    tpu.vector_store %arg5[%c0_12, %c0_13, %c0_14], %23 {strides = array<i32>} : memref<1x64x16xf32, #tpu.memory_space<vmem>>, vector<1x64x16xf32>,
    return
  }
  func.func @transform_0(%arg0: i32, %arg1: i32) -> (i32, i32, i32) {
    %c0_i32 = arith.constant 0 : i32
    %c0_i32_0 = arith.constant 0 : i32
    %c0_i32_1 = arith.constant 0 : i32
    return %arg0, %c0_i32, %c0_i32_0 : i32, i32, i32
  }
  func.func @transform_1(%arg0: i32, %arg1: i32) -> (i32, i32, i32) {
    %c0_i32 = arith.constant 0 : i32
    %c0_i32_0 = arith.constant 0 : i32
    return %arg0, %c0_i32, %arg1 : i32, i32, i32
  }
  func.func @transform_2(%arg0: i32, %arg1: i32) -> (i32, i32, i32) {
    %c0_i32 = arith.constant 0 : i32
    %c0_i32_0 = arith.constant 0 : i32
    %c0_i32_1 = arith.constant 0 : i32
    return %arg0, %c0_i32, %c0_i32_0 : i32, i32, i32
  }
  func.func @transform_3(%arg0: i32, %arg1: i32) -> (i32, i32, i32) {
    %c0_i32 = arith.constant 0 : i32
    %c0_i32_0 = arith.constant 0 : i32
    return %arg0, %c0_i32, %arg1 : i32, i32, i32
  }
}

</mosaic_0001>

<llo_original>
// kernel: tpu_custom_call.1
$region0: #{tpu_custom_call.1}
  #allocation0 [shape = 'u32[]', space=smem, size = 0x4, offset = 0x4, fixed_abs, tag = 'smem constant byte address 0x4 - core index']
  #allocation1 [shape = 'u32[144,128]{1,0:T(1,128)}', space=vmem, size = 0x12000, scoped, tag = 'internal scratch']
  %s0 = inlined_call_operand.vmem [shape: bf16[2,32,32], index: 0, kind: input, shape index: {}]
  %s1 = inlined_call_operand.vmem [shape: bf16[2,32,16], index: 1, kind: input, shape index: {}]
  %s2 = inlined_call_operand.vmem [shape: bf16[2,64,32], index: 2, kind: input, shape index: {}]
  %s3 = inlined_call_operand.vmem [shape: f32[2,64,16], index: 3, kind: output, shape index: {}]
  %s4 = sld [smem:[#allocation0]]
  $region45: #{tpu_custom_call.1} parent=0
    _
  %s6 = ssub.s32 1, %s4
  %s7 = scalar_select 0, %s6, %s4
  loop: start=0, step=1, limit=4
  $region2: #{tpu_custom_call.1} parent=0 // loop_pre_header
    _
  $region3: #{tpu_custom_call.1} parent=0 // loop_header
    %s9 = sphi 0, %s13
    %p10 = scmp.ge.s32.totalorder %s9, 4
    %s16 = sphi 0, %s28
    %s17 = sphi 0, %s24
    %s18 = sphi 0, %s16
    %s19 = sphi 0, %s17
    %s20 = sphi 0, %s18
    %s21 = sphi 0, %s19
    %s31 = sphi 0, %s33
    %s34 = sphi 0, %s31
    %s35 = sphi 0, %s34
    %s51 = sphi 0, %s35
    %s59 = sphi 0, %s61
    %s62 = sphi 0, %s59
    %s63 = sphi 0, %s62
    %s79 = sphi 0, %s63
    %s85 = sphi 0, %s87
    %s88 = sphi 0, %s85
    %s89 = sphi 0, %s88
    %s105 = sphi 0, %s89
    %s113 = sphi 0, %s115
    %s116 = sphi 0, %s113
    %s117 = sphi 0, %s116
    %s133 = sphi 0, %s117
  $region4: #{tpu_custom_call.1} parent=0 // loop_header_branch
    %12 = sbr.rel (%p10) target = $region8
  $region5: #{tpu_custom_call.1} parent=0 // loop_body
    %s14 = ssub.s32 %s9, 1
    %s15 = ssub.s32 %s9, 2
    %s22 = sadd.s32 1, %s17
    %p23 = scmp.ge.s32.totalorder %s22, 1
    %s24 = scalar_select %p23, 0, %s22
    %s25 = sadd.s32 1, %s16
    %s26 = scalar_select %p23, %s25, %s16
    %p27 = scmp.ge.s32.totalorder %s26, 2
    %s28 = scalar_select %p27, 0, %s26
    %s29 = ssub.s32 %s16, %s28
    %p30 = scmp.eq.s32.totalorder %s29, 0
    %s32 = sadd.s32 %s31, 1
    %s33 = scalar_select %p30, %s31, %s32
    %p36 = pneg %p30
    %p37 = scmp.eq.s32.totalorder %s9, 1
    %p38 = por %p36, %p37
    %p39 = scmp.ne.s32.totalorder %s31, %s34
    %p40 = scmp.eq.s32.totalorder %s9, 0
    %p41 = por %p39, %p40
    %p42 = scmp.ne.s32.totalorder %s31, %s34
    %p43 = scmp.eq.s32.totalorder %s14, 1
    %p44 = por %p42, %p43
    %p45 = scmp.ne.s32.totalorder %s34, %s35
    %p46 = scmp.eq.s32.totalorder %s14, 0
    %p47 = por %p45, %p46
    %p48 = scmp.ne.s32.totalorder %s34, %s35
    %p49 = scmp.eq.s32.totalorder %s15, 1
    %p50 = por %p48, %p49
    %p52 = scmp.ne.s32.totalorder %s35, %s51
    %p53 = scmp.eq.s32.totalorder %s15, 0
    %p54 = por %p52, %p53
    %s55 = ssub.s32 %s16, %s28
    %s56 = ssub.s32 %s17, %s24
    %s57 = sor.u32 %s55, %s56
    %p58 = scmp.eq.s32.totalorder %s57, 0
    %s60 = sadd.s32 %s59, 1
    %s61 = scalar_select %p58, %s59, %s60
    %p64 = pneg %p58
    %p65 = scmp.eq.s32.totalorder %s9, 1
    %p66 = por %p64, %p65
    %p67 = scmp.ne.s32.totalorder %s59, %s62
    %p68 = scmp.eq.s32.totalorder %s9, 0
    %p69 = por %p67, %p68
    %p70 = scmp.ne.s32.totalorder %s59, %s62
    %p71 = scmp.eq.s32.totalorder %s14, 1
    %p72 = por %p70, %p71
    %p73 = scmp.ne.s32.totalorder %s62, %s63
    %p74 = scmp.eq.s32.totalorder %s14, 0
    %p75 = por %p73, %p74
    %p76 = scmp.ne.s32.totalorder %s62, %s63
    %p77 = scmp.eq.s32.totalorder %s15, 1
    %p78 = por %p76, %p77
    %p80 = scmp.ne.s32.totalorder %s63, %s79
    %p81 = scmp.eq.s32.totalorder %s15, 0
    %p82 = por %p80, %p81
    %s83 = ssub.s32 %s16, %s28
    %p84 = scmp.eq.s32.totalorder %s83, 0
    %s86 = sadd.s32 %s85, 1
    %s87 = scalar_select %p84, %s85, %s86
    %p90 = pneg %p84
    %p91 = scmp.eq.s32.totalorder %s9, 1
    %p92 = por %p90, %p91
    %p93 = scmp.ne.s32.totalorder %s85, %s88
    %p94 = scmp.eq.s32.totalorder %s9, 0
    %p95 = por %p93, %p94
    %p96 = scmp.ne.s32.totalorder %s85, %s88
    %p97 = scmp.eq.s32.totalorder %s14, 1
    %p98 = por %p96, %p97
    %p99 = scmp.ne.s32.totalorder %s88, %s89
    %p100 = scmp.eq.s32.totalorder %s14, 0
    %p101 = por %p99, %p100
    %p102 = scmp.ne.s32.totalorder %s88, %s89
    %p103 = scmp.eq.s32.totalorder %s15, 1
    %p104 = por %p102, %p103
    %p106 = scmp.ne.s32.totalorder %s89, %s105
    %p107 = scmp.eq.s32.totalorder %s15, 0
    %p108 = por %p106, %p107
    %s109 = ssub.s32 %s16, %s28
    %s110 = ssub.s32 %s17, %s24
    %s111 = sor.u32 %s109, %s110
    %p112 = scmp.eq.s32.totalorder %s111, 0
    %s114 = sadd.s32 %s113, 1
    %s115 = scalar_select %p112, %s113, %s114
    %p118 = pneg %p112
    %p119 = scmp.eq.s32.totalorder %s9, 1
    %p120 = por %p118, %p119
    %p121 = scmp.ne.s32.totalorder %s113, %s116
    %p122 = scmp.eq.s32.totalorder %s9, 0
    %p123 = por %p121, %p122
    %p124 = scmp.ne.s32.totalorder %s113, %s116
    %p125 = scmp.eq.s32.totalorder %s14, 1
    %p126 = por %p124, %p125
    %p127 = scmp.ne.s32.totalorder %s116, %s117
    %p128 = scmp.eq.s32.totalorder %s14, 0
    %p129 = por %p127, %p128
    %p130 = scmp.ne.s32.totalorder %s116, %s117
    %p131 = scmp.eq.s32.totalorder %s15, 1
    %p132 = por %p130, %p131
    %p134 = scmp.ne.s32.totalorder %s117, %s133
    %p135 = scmp.eq.s32.totalorder %s15, 0
    %p136 = por %p134, %p135
    %p137 = scmp.le.s32.totalorder 1, %s9
    %p138 = scmp.lt.s32.totalorder %s9, 3
    %p139 = pnand %p137, %p138
    %p140 = pneg %p139
    // Predicated region
    $region9: #{tpu_custom_call.1} parent=5 // pred_check
      _
    $region10: #{tpu_custom_call.1} parent=5 // pred_check_branch
      %142 = sbr.rel (%p139) target = $region12
    $region11: #{tpu_custom_call.1} parent=5 // pred_region
      %s143 = ssub.s32 %s9, 1
    $region12: #{tpu_custom_call.1} parent=5 // pred_fallthru
      _
    %p144 = scmp.lt.s32.totalorder %s9, 2
    // Predicated region
    $region13: #{tpu_custom_call.1} parent=5 // pred_check
      %p145 = pneg %p144
    $region14: #{tpu_custom_call.1} parent=5 // pred_check_branch
      %147 = sbr.rel (%p145) target = $region16
    $region15: #{tpu_custom_call.1} parent=5 // pred_region
      // Predicated region
      $region17: #{tpu_custom_call.1} parent=15 // pred_check
        %p148 = pneg %p41
      $region18: #{tpu_custom_call.1} parent=15 // pred_check_branch
        %150 = sbr.rel (%p148) target = $region20
      $region19: #{tpu_custom_call.1} parent=15 // pred_region
        %p151 = scmp.lt.s32.totalorder %s16, 1
        %s152 = scalar_select %p151, %s16, 1
        %s153 = smul.addr %s152, 4
        %s154 = smul.addr %s153, 4
        %s155 = scalar_lea.vmem %s0, %s154
      $region20: #{tpu_custom_call.1} parent=15 // pred_fallthru
        _
      // Predicated region
      $region21: #{tpu_custom_call.1} parent=15 // pred_check
        %p156 = pneg %p69
      $region22: #{tpu_custom_call.1} parent=15 // pred_check_branch
        %158 = sbr.rel (%p156) target = $region24
      $region23: #{tpu_custom_call.1} parent=15 // pred_region
        %p159 = scmp.lt.s32.totalorder %s16, 1
        %s160 = scalar_select %p159, %s16, 1
        %p161 = scmp.lt.s32.totalorder %s17, 0
        %s162 = scalar_select %p161, %s17, 0
        %s163 = smul.addr %s160, 4
        %s164 = sadd.s32 %s162, %s163
        %s165 = smul.addr %s164, 4
        %s166 = scalar_lea.vmem %s1, %s165
      $region24: #{tpu_custom_call.1} parent=15 // pred_fallthru
        _
      // Predicated region
      $region25: #{tpu_custom_call.1} parent=15 // pred_check
        %p167 = pneg %p95
      $region26: #{tpu_custom_call.1} parent=15 // pred_check_branch
        %169 = sbr.rel (%p167) target = $region28
      $region27: #{tpu_custom_call.1} parent=15 // pred_region
        %p170 = scmp.lt.s32.totalorder %s16, 1
        %s171 = scalar_select %p170, %s16, 1
        %s172 = smul.addr %s171, 8
        %s173 = smul.addr %s172, 4
        %s174 = scalar_lea.vmem %s2, %s173
      $region28: #{tpu_custom_call.1} parent=15 // pred_fallthru
        _
    $region16: #{tpu_custom_call.1} parent=5 // pred_fallthru
      _
    %p175 = scmp.le.s32.totalorder 1, %s9
    %p176 = scmp.lt.s32.totalorder %s9, 3
    %p177 = pnand %p175, %p176
    %p178 = pneg %p177
    // Predicated region
    $region29: #{tpu_custom_call.1} parent=5 // pred_check
      _
    $region30: #{tpu_custom_call.1} parent=5 // pred_check_branch
      %180 = sbr.rel (%p177) target = $region32
    $region31: #{tpu_custom_call.1} parent=5 // pred_region
      %s181 = ssub.s32 %s9, 1
      %p182 = scmp.lt.s32.totalorder %s18, 1
      %s183 = scalar_select %p182, %s18, 1
      %s184 = smul.addr %s183, 4
      %s185 = smul.addr %s184, 4
      %s186 = scalar_lea.vmem %s0, %s185
      %p187 = pneg %p47
      %p188 = pneg %p44
      %p189 = scmp.lt.s32.totalorder %s18, 1
      %s190 = scalar_select %p189, %s18, 1
      %p191 = scmp.lt.s32.totalorder %s19, 0
      %s192 = scalar_select %p191, %s19, 0
      %s193 = smul.addr %s190, 4
      %s194 = sadd.s32 %s192, %s193
      %s195 = smul.addr %s194, 4
      %s196 = scalar_lea.vmem %s1, %s195
      %p197 = pneg %p75
      %p198 = pneg %p72
      %p199 = scmp.lt.s32.totalorder %s18, 1
      %s200 = scalar_select %p199, %s18, 1
      %s201 = smul.addr %s200, 8
      %s202 = smul.addr %s201, 4
      %s203 = scalar_lea.vmem %s2, %s202
      %p204 = pneg %p101
      %p205 = pneg %p98
      %p206 = pneg %p129
      %p207 = pneg %p126
      %p208 = scmp.lt.s32.totalorder %s18, 1
      %s209 = scalar_select %p208, %s18, 1
      %p210 = scmp.lt.s32.totalorder %s19, 0
      %s211 = scalar_select %p210, %s19, 0
      %s212 = smul.addr %s209, 8
      %s213 = sadd.s32 %s211, %s212
      %s214 = smul.addr %s213, 8
      %s215 = scalar_lea.vmem %s3, %s214
      %p216 = scmp.lt.s32.totalorder %s18, 1
      %s217 = scalar_select %p216, %s18, 1
      %s218 = smul.addr %s217, 4
      %s219 = smul.addr %s218, 4
      %s220 = scalar_lea.vmem %s0, %s219
      %p221 = scmp.lt.s32.totalorder %s18, 1
      %s222 = scalar_select %p221, %s18, 1
      %p223 = scmp.lt.s32.totalorder %s19, 0
      %s224 = scalar_select %p223, %s19, 0
      %s225 = smul.addr %s222, 4
      %s226 = sadd.s32 %s224, %s225
      %s227 = smul.addr %s226, 4
      %s228 = scalar_lea.vmem %s1, %s227
      %p229 = scmp.lt.s32.totalorder %s18, 1
      %s230 = scalar_select %p229, %s18, 1
      %s231 = smul.addr %s230, 8
      %s232 = smul.addr %s231, 4
      %s233 = scalar_lea.vmem %s2, %s232
      %p234 = scmp.lt.s32.totalorder %s18, 1
      %s235 = scalar_select %p234, %s18, 1
      %p236 = scmp.lt.s32.totalorder %s19, 0
      %s237 = scalar_select %p236, %s19, 0
      %s238 = smul.addr %s235, 8
      %s239 = sadd.s32 %s237, %s238
      %s240 = smul.addr %s239, 8
      %s241 = scalar_lea.vmem %s3, %s240
      %v243 = vld [vmem:[%s228] sm:$0xf]
      %v244 = vld [vmem:[%s228 + $0x4] sm:$0xf]
      %v245 = vld [vmem:[%s228 + $0x8] sm:$0xf]
      %v246 = vld [vmem:[%s228 + $0xc] sm:$0xf]
      %v247 = vld [vmem:[%s220] sm:$0xf]
      %v248 = vld [vmem:[%s220 + $0x4] sm:$0xf]
      %v249 = vld [vmem:[%s220 + $0x8] sm:$0xf]
      %v250 = vld [vmem:[%s220 + $0xc] sm:$0xf]
      %v255 = vunpack.c.l.b16 %v243
      %v256 = vunpack.c.l.b16 %v244
      %v257 = vunpack.c.l.b16 %v245
      %v258 = vunpack.c.l.b16 %v246
      %v259 = vpack.c.b16 %v256, %v255
      %v260 = vpack.c.b16 %v258, %v257
      %263 = vxpose.xlu0.c.b16.start [1/8] %v259, 128
      %264 = vxpose.xlu0.c.b16.cont [2/8] %v260, 128
      %265 = vxpose.xlu0.c.b16.cont [3/8] 0, 128
      %266 = vxpose.xlu0.c.b16.cont [4/8] 0, 128
      %267 = vxpose.xlu0.c.b16.cont [5/8] 0, 128
      %268 = vxpose.xlu0.c.b16.cont [6/8] 0, 128
      %269 = vxpose.xlu0.c.b16.cont [7/8] 0, 128
      %270 = vxpose.xlu0.c.b16.end [8/8] 0, 128
      %v271 = vpop.trf.xlu0
      %v272 = vpop.trf.xlu0
      %v273 = vpop.trf.xlu0
      %v274 = vpop.trf.xlu0
      %v275 = vpop.trf.xlu0
      %v276 = vpop.trf.xlu0
      %v277 = vpop.trf.xlu0
      %v278 = vpop.trf.xlu0
      %v283 = vunpack.c.l.b16 %v247
      %v284 = vunpack.c.l.b16 %v248
      %v285 = vunpack.c.l.b16 %v249
      %v286 = vunpack.c.l.b16 %v250
      %v287 = vpack.c.b16 %v284, %v283
      %v288 = vpack.c.b16 %v286, %v285
      %vm291 = vcmask 261120
      %v293 = vsel %vm291, %v271, 0
      %295 = vmatprep.subr.bf16.mxu0 0
      %296 = vmatpush1.bf16.msra.mxu0 0
      %297 = vmatprep.subr.bf16.mxu0 0
      %298 = vmatpush1.bf16.msra.mxu0 0
      %299 = vmatprep.subr.bf16.mxu0 0
      %300 = vmatpush1.bf16.msra.mxu0 0
      %301 = vmatprep.subr.bf16.mxu0 0
      %302 = vmatpush1.bf16.msra.mxu0 0
      %303 = vmatprep.subr.bf16.mxu0 0
      %304 = vmatpush1.bf16.msra.mxu0 0
      %305 = vmatprep.subr.bf16.mxu0 0
      %306 = vmatpush1.bf16.msra.mxu0 0
      %307 = vmatprep.subr.bf16.mxu0 0
      %308 = vmatpush1.bf16.msra.mxu0 %v288
      %309 = vmatprep.subr.bf16.mxu0 0
      %310 = vmatpush1.bf16.msra.mxu0 %v287
      %311 = vmatprep.subr.bf16.mxu0 0
      %312 = vmatpush2.bf16.msra.mxu0 0
      %313 = vmatprep.subr.bf16.mxu0 0
      %314 = vmatpush2.bf16.msra.mxu0 0
      %315 = vmatprep.subr.bf16.mxu0 0
      %316 = vmatpush2.bf16.msra.mxu0 0
      %317 = vmatprep.subr.bf16.mxu0 0
      %318 = vmatpush2.bf16.msra.mxu0 0
      %319 = vmatprep.subr.bf16.mxu0 0
      %320 = vmatpush2.bf16.msra.mxu0 0
      %321 = vmatprep.subr.bf16.mxu0 0
      %322 = vmatpush2.bf16.msra.mxu0 0
      %323 = vmatprep.subr.bf16.mxu0 0
      %324 = vmatpush2.bf16.msra.mxu0 0
      %325 = vmatprep.subr.bf16.mxu0 0
      %326 = vmatpush2.bf16.msra.mxu0 0
      %327 = vmatprep.mubr.bf16.mxu0 0
      %328 = vmatmul.mubr.bf16.gmra.mxu0 %v293
      %v329 = vpop.f32.mrf.mxu0
      %v330 = vadd.f32 0.0, %v329
      %v331 = vpop.f32.mrf.mxu0
      %v332 = vpop.f32.mrf.mxu0
      %v333 = vadd.f32 0.0, %v332
      %v334 = vpop.f32.mrf.mxu0
      %335 = vdwg.mxu0
      %v336 = vmul.f32 %v330, 0.17677669
      %v337 = vmul.f32 %v333, 0.17677669
      %v338 = vsel %vm291, %v336, -inf
      %339 = vmax.xlane.f32.xlu0 %v338
      %v340 = vpop.xlane.xlu0 %339
      %v341 = vsel %vm291, %v337, -inf
      %342 = vmax.xlane.f32.xlu0 %v341
      %v343 = vpop.xlane.xlu0 %342
      %v344 = vsub.f32 %v336, %v340
      %v345 = vsub.f32 %v337, %v343
      %v346 = vmul.f32 %v344, 1.442695
      %v347 = vpow.pop %v346
      %v348 = vmul.f32 %v345, 1.442695
      %v349 = vpow.pop %v348
      %v350 = vsel %vm291, %v347, 0.0
      %351 = vadd.xlane.f32.xlu0 %v350
      %v352 = vpop.xlane.xlu0 %351
      %v353 = vsel %vm291, %v349, 0.0
      %354 = vadd.xlane.f32.xlu0 %v353
      %v355 = vpop.xlane.xlu0 %354
      %v356 = vrcp.pop %v352
      %v357 = vrcp.pop %v355
      %v358 = vmul.f32 %v347, %v356
      %v359 = vmul.f32 %v349, %v357
      %v360 = vld [vmem:[%s233] sm:$0xf]
      %v361 = vld [vmem:[%s233 + $0x4] sm:$0xf]
      %v362 = vld [vmem:[%s233 + $0x8] sm:$0xf]
      %v363 = vld [vmem:[%s233 + $0xc] sm:$0xf]
      %v364 = vld [vmem:[%s233 + $0x10] sm:$0xf]
      %v365 = vld [vmem:[%s233 + $0x14] sm:$0xf]
      %v366 = vld [vmem:[%s233 + $0x18] sm:$0xf]
      %v367 = vld [vmem:[%s233 + $0x1c] sm:$0xf]
      %v368 = vpack.c.bf16 %v359, %v358
      %v377 = vunpack.c.l.b16 %v360
      %v378 = vunpack.c.l.b16 %v361
      %v379 = vunpack.c.l.b16 %v362
      %v380 = vunpack.c.l.b16 %v363
      %v381 = vunpack.c.l.b16 %v364
      %v382 = vunpack.c.l.b16 %v365
      %v383 = vunpack.c.l.b16 %v366
      %v384 = vunpack.c.l.b16 %v367
      %v385 = vpack.c.b16 %v378, %v377
      %v386 = vpack.c.b16 %v380, %v379
      %v387 = vpack.c.b16 %v382, %v381
      %v388 = vpack.c.b16 %v384, %v383
      %v390 = vsel %vm291, %v385, 0
      %v393 = vsel %vm291, %v386, 0
      %v396 = vsel %vm291, %v387, 0
      %v399 = vsel %vm291, %v388, 0
      %v402 = vsel %vm291, %v368, 0
      %404 = vmatprep.subr.bf16.mxu0 0
      %405 = vmatpush1.bf16.xpose.msra.mxu0 0
      %406 = vmatprep.subr.bf16.mxu0 0
      %407 = vmatpush1.bf16.xpose.msra.mxu0 0
      %408 = vmatprep.subr.bf16.mxu0 0
      %409 = vmatpush1.bf16.xpose.msra.mxu0 0
      %410 = vmatprep.subr.bf16.mxu0 0
      %411 = vmatpush1.bf16.xpose.msra.mxu0 0
      %412 = vmatprep.subr.bf16.mxu0 0
      %413 = vmatpush1.bf16.xpose.msra.mxu0 0
      %414 = vmatprep.subr.bf16.mxu0 0
      %415 = vmatpush1.bf16.xpose.msra.mxu0 0
      %416 = vmatprep.subr.bf16.mxu0 0
      %417 = vmatpush1.bf16.xpose.msra.mxu0 0
      %418 = vmatprep.subr.bf16.mxu0 0
      %419 = vmatpush1.bf16.xpose.msra.mxu0 %v402
      %420 = vmatprep.subr.bf16.mxu0 0
      %421 = vmatpush2.bf16.xpose.msra.mxu0 0
      %422 = vmatprep.subr.bf16.mxu0 0
      %423 = vmatpush2.bf16.xpose.msra.mxu0 0
      %424 = vmatprep.subr.bf16.mxu0 0
      %425 = vmatpush2.bf16.xpose.msra.mxu0 0
      %426 = vmatprep.subr.bf16.mxu0 0
      %427 = vmatpush2.bf16.xpose.msra.mxu0 0
      %428 = vmatprep.subr.bf16.mxu0 0
      %429 = vmatpush2.bf16.xpose.msra.mxu0 0
      %430 = vmatprep.subr.bf16.mxu0 0
      %431 = vmatpush2.bf16.xpose.msra.mxu0 0
      %432 = vmatprep.subr.bf16.mxu0 0
      %433 = vmatpush2.bf16.xpose.msra.mxu0 0
      %434 = vmatprep.subr.bf16.mxu0 0
      %435 = vmatpush2.bf16.xpose.msra.mxu0 0
      %436 = vmatprep.mubr.bf16.mxu0 0
      %437 = vmatmul.mubr.bf16.gmra.mxu0 %v390
      %v438 = vpop.f32.mrf.mxu0
      %v439 = vadd.f32 0.0, %v438
      %v440 = vpop.f32.mrf.mxu0
      %v441 = vpop.f32.mrf.mxu0
      %v442 = vadd.f32 0.0, %v441
      %v443 = vpop.f32.mrf.mxu0
      %444 = vmatprep.mubr.bf16.mxu0 0
      %445 = vmatmul.mubr.bf16.gmra.mxu0 %v393
      %v446 = vpop.f32.mrf.mxu0
      %v447 = vadd.f32 0.0, %v446
      %v448 = vpop.f32.mrf.mxu0
      %v449 = vpop.f32.mrf.mxu0
      %v450 = vadd.f32 0.0, %v449
      %v451 = vpop.f32.mrf.mxu0
      %452 = vmatprep.mubr.bf16.mxu0 0
      %453 = vmatmul.mubr.bf16.gmra.mxu0 %v396
      %v454 = vpop.f32.mrf.mxu0
      %v455 = vadd.f32 0.0, %v454
      %v456 = vpop.f32.mrf.mxu0
      %v457 = vpop.f32.mrf.mxu0
      %v458 = vadd.f32 0.0, %v457
      %v459 = vpop.f32.mrf.mxu0
      %460 = vmatprep.mubr.bf16.mxu0 0
      %461 = vmatmul.mubr.bf16.gmra.mxu0 %v399
      %v462 = vpop.f32.mrf.mxu0
      %v463 = vadd.f32 0.0, %v462
      %v464 = vpop.f32.mrf.mxu0
      %v465 = vpop.f32.mrf.mxu0
      %v466 = vadd.f32 0.0, %v465
      %v467 = vpop.f32.mrf.mxu0
      %468 = vdwg.mxu0
      %vm469 = vcmask 130048
      %470 = vst.msk [vmem:[%s241] sm:$0xff] %vm469, %v439
      %471 = vst.msk [vmem:[%s241 + $0x8] sm:$0xff] %vm469, %v442
      %472 = vst.msk [vmem:[%s241 + $0x10] sm:$0xff] %vm469, %v447
      %473 = vst.msk [vmem:[%s241 + $0x18] sm:$0xff] %vm469, %v450
      %474 = vst.msk [vmem:[%s241 + $0x20] sm:$0xff] %vm469, %v455
      %475 = vst.msk [vmem:[%s241 + $0x28] sm:$0xff] %vm469, %v458
      %476 = vst.msk [vmem:[%s241 + $0x30] sm:$0xff] %vm469, %v463
      %477 = vst.msk [vmem:[%s241 + $0x38] sm:$0xff] %vm469, %v466
      %p478 = scmp.lt.s32.totalorder %s18, 1
      %s479 = scalar_select %p478, %s18, 1
      %p480 = scmp.lt.s32.totalorder %s19, 0
      %s481 = scalar_select %p480, %s19, 0
      %s482 = smul.addr %s479, 8
      %s483 = sadd.s32 %s481, %s482
      %s484 = smul.addr %s483, 8
      %s485 = scalar_lea.vmem %s3, %s484
      // Predicated region
      $region33: #{tpu_custom_call.1} parent=31 // pred_check
        %p486 = pneg %p126
      $region34: #{tpu_custom_call.1} parent=31 // pred_check_branch
        %488 = sbr.rel (%p486) target = $region36
      $region35: #{tpu_custom_call.1} parent=31 // pred_region
        _
      $region36: #{tpu_custom_call.1} parent=31 // pred_fallthru
        _
    $region32: #{tpu_custom_call.1} parent=5 // pred_fallthru
      _
    %p489 = scmp.le.s32.totalorder 2, %s9
    // Predicated region
    $region37: #{tpu_custom_call.1} parent=5 // pred_check
      %p490 = pneg %p489
    $region38: #{tpu_custom_call.1} parent=5 // pred_check_branch
      %492 = sbr.rel (%p490) target = $region40
    $region39: #{tpu_custom_call.1} parent=5 // pred_region
      %s493 = ssub.s32 %s9, 2
      // Predicated region
      $region41: #{tpu_custom_call.1} parent=39 // pred_check
        %p494 = pneg %p132
      $region42: #{tpu_custom_call.1} parent=39 // pred_check_branch
        %496 = sbr.rel (%p494) target = $region44
      $region43: #{tpu_custom_call.1} parent=39 // pred_region
        %p497 = scmp.lt.s32.totalorder %s20, 1
        %s498 = scalar_select %p497, %s20, 1
        %p499 = scmp.lt.s32.totalorder %s21, 0
        %s500 = scalar_select %p499, %s21, 0
        %s501 = smul.addr %s498, 8
        %s502 = sadd.s32 %s500, %s501
        %s503 = smul.addr %s502, 8
        %s504 = scalar_lea.vmem %s3, %s503
      $region44: #{tpu_custom_call.1} parent=39 // pred_fallthru
        _
    $region40: #{tpu_custom_call.1} parent=5 // pred_fallthru
      _
  $region6: #{tpu_custom_call.1} parent=0 // loop_footer
    %s13 = sadd.s32 1, %s9
  $region7: #{tpu_custom_call.1} parent=0 // loop_footer_branch
    %8 = sbr.rel target = $region3
  $region8: #{tpu_custom_call.1} parent=0 // loop_exit
    _

</llo_original>
